<compile_context>
chip_gen: v7x
topology: tpu7x:2x2x1
jax: 0.10.0
libtpu: 0.0.40
codegen_flags: <defaults>
</compile_context>

<pallas_src>
import functools

import jax
import jax.numpy as jnp
from jax import lax
from jax.experimental import pallas as pl
from jax.experimental.pallas import tpu as pltpu

_EPS_SQ = 1e-24                       # (1e-12)^2: F.normalize eps on the squared norm
_VMEM_LIMIT = 32 * 1024 * 1024        # raises v5e's 16 MiB default; == scoped default v6e/v7x
_ROW_BLOCK_BUDGET = 20 * 1024 * 1024  # conservative so it also fits v7x (64 MiB physical)
_SINGLE_BUDGET = 4 * 1024 * 1024      # below this, one invocation beats any grid overhead


# --------------------------------------------------------------------------------------
# Kernels
# --------------------------------------------------------------------------------------
def _row_block_kernel(zq_ref, zp_ref, zk_ref, loss_ref, *, inv_temp):
    """One query row tile vs the full (VMEM-resident) key matrix.

    zq_ref: (tq, d) normalized queries * 1/temp (matmul dtype)
    zp_ref: (tq, d) normalized positive-pair rows (matmul dtype)
    zk_ref: (n,  d) normalized keys (matmul dtype)
    loss_ref: (tq, 1) per-row NT-Xent loss (f32)
    """
    zq = zq_ref[...]
    # Transpose-free contraction on the feature axis of both operands; f32 accumulate.
    sim = lax.dot_general(zq, zk_ref[...], (((1,), (1,)), ((), ())),
                          preferred_element_type=jnp.float32)          # (tq, n)
    # Shift by the known maximum (diag == inv_temp) -> no f32 overflow, free constant fold.
    e = jnp.exp(sim - inv_temp)
    # diag term after the shift is exp(0) == 1 (z rows are unit-norm).
    exp_neg = jnp.sum(e, axis=1, keepdims=True) - 1.0                  # (tq, 1)
    pos = jnp.sum(zq.astype(jnp.float32) * zp_ref[...].astype(jnp.float32),
                  axis=1, keepdims=True) - inv_temp                    # shifted positive
    # -log(exp(pos) / (exp(pos) + exp_neg)), shift-invariant form.
    loss_ref[...] = jnp.log(jnp.exp(pos) + exp_neg) - pos


def _tiled_kernel(zq_ref, zp_ref, zk_ref, loss_ref, acc_ref, *, inv_temp, lane_w):
    """2-D tiled path (query tiles x key tiles) with a lane-blocked running row-sum."""
    ki = pl.program_id(1)

    @pl.when(ki == 0)
    def _():
        acc_ref[...] = jnp.zeros_like(acc_ref)

    zq = zq_ref[...]                                                   # (tq, d) pre-scaled
    sim = lax.dot_general(zq, zk_ref[...], (((1,), (1,)), ((), ())),
                          preferred_element_type=jnp.float32)          # (tq, tk)
    e = jnp.exp(sim - inv_temp)
    tq, tk = e.shape
    if tk == lane_w:
        part = e                                                       # acc is (tq, tk)
    else:
        # Lane-blocked partial sum: pure VPU vreg adds, keeps the XLU out of the hot loop.
        part = jnp.sum(e.reshape(tq, tk // lane_w, lane_w), axis=1)    # (tq, 128)
    acc_ref[...] += part

    @pl.when(ki == pl.num_programs(1) - 1)
    def _():
        # Single cross-lane reduce per row tile, only in the epilogue.
        exp_neg = jnp.sum(acc_ref[...], axis=1, keepdims=True) - 1.0
        pos = jnp.sum(zq.astype(jnp.float32) * zp_ref[...].astype(jnp.float32),
                      axis=1, keepdims=True) - inv_temp
        loss_ref[...] = jnp.log(jnp.exp(pos) + exp_neg) - pos


# --------------------------------------------------------------------------------------
# Wrapper helpers
# --------------------------------------------------------------------------------------
def _largest_tile(dim, cap, multiple):
    """Largest t <= cap with t % multiple == 0 and dim % t == 0 (None if none)."""
    t = min(cap, dim)
    t -= t % multiple
    while t >= multiple:
        if dim % t == 0:
            return t
        t -= multiple
    return None


def _row_block_vmem(n, d, tq, elt):
    """Conservative VMEM estimate for the resident-key / single-block path."""
    return (2 * tq * d * elt            # query tile (double-buffered)
            + 2 * tq * d * elt          # positive tile
            + 2 * n * d * elt           # resident keys (count x2 to be safe)
            + 2 * tq * 4                # loss tile
            + 3 * tq * n * 4)           # sim / exp f32 intermediates


def _tiled_vmem(d, tq, tk, lane_w, elt):
    return (4 * tq * d * elt + 2 * tk * d * elt + 2 * tq * 4
            + tq * lane_w * 4 + 3 * tq * tk * 4)


def _row_block_call(zq_op, zp_src, zk_op, *, n, d, tq, zp_index_map, inv_temp):
    num_q = n // tq
    kernel = functools.partial(_row_block_kernel, inv_temp=inv_temp)
    return pl.pallas_call(
        kernel,
        out_shape=jax.ShapeDtypeStruct((n, 1), jnp.float32),
        grid=(num_q,),
        in_specs=[
            pl.BlockSpec((tq, d), lambda qi: (qi, 0)),   # query rows (scaled by 1/temp)
            pl.BlockSpec((tq, d), zp_index_map),         # positive-pair rows
            pl.BlockSpec((n, d), lambda qi: (0, 0)),     # full key matrix, DMA'd once
        ],
        out_specs=pl.BlockSpec((tq, 1), lambda qi: (qi, 0)),
        compiler_params=pltpu.CompilerParams(
            dimension_semantics=("parallel",),
            vmem_limit_bytes=_VMEM_LIMIT),
    )(zq_op, zp_src, zk_op)


# --------------------------------------------------------------------------------------
# Public entry point
# --------------------------------------------------------------------------------------
def contrast_loss(x_i, x_j, temperature=0.5, *, matmul_dtype=jnp.bfloat16,
                  path=None, tq=None, tk=None):
    """Pallas implementation of Contrast.forward(x_i, x_j) -> scalar loss."""
    assert x_i.shape == x_j.shape and x_i.ndim == 2
    b, d = x_i.shape
    n = 2 * b
    inv_temp = float(1.0 / temperature)
    elt = jnp.dtype(matmul_dtype).itemsize

    # Glue: cat + single O(n*d) normalization pass (rsqrt); 1/temp folded into queries only.
    z = jnp.concatenate([x_i, x_j], axis=0).astype(jnp.float32)
    z_norm = z * lax.rsqrt(jnp.maximum(jnp.sum(z * z, axis=1, keepdims=True), _EPS_SQ))
    zk_op = z_norm.astype(matmul_dtype)                 # keys / positives
    zq_op = (z_norm * inv_temp).astype(matmul_dtype)    # queries (1/temp folded in)

    # ---- dispatch ------------------------------------------------------------------
    if path is None:
        if b % 8 != 0 or _row_block_vmem(n, d, n, elt) <= _SINGLE_BUDGET:
            path = "single"
        elif _row_block_vmem(n, d, 8, elt) <= _ROW_BLOCK_BUDGET:
            path = "resident"
        else:
            path = "tiled"

    if path == "single":
        # Whole problem in one invocation; positives supplied by a wrapper-side roll.
        assert _row_block_vmem(n, d, n, elt) <= _ROW_BLOCK_BUDGET, \
            "problem too large for the single-block path"
        # TODO(synk): pad + mask to keep the tiled paths for large non-multiple-of-8 batches.
        zp_op = jnp.roll(zk_op, -b, axis=0)             # row r -> row (r + b) mod n
        per_row = _row_block_call(zq_op, zp_op, zk_op, n=n, d=d, tq=n,
                                  zp_index_map=lambda qi: (qi, 0), inv_temp=inv_temp)

    elif path == "resident":
        if tq is None:
            cand = _largest_tile(b, 1024, 8)
            while cand is not None and _row_block_vmem(n, d, cand, elt) > _ROW_BLOCK_BUDGET:
                cand = _largest_tile(b, cand - 8, 8)
            tq = cand
        assert tq is not None and b % tq == 0 and tq % 8 == 0, (b, tq)
        num_q = n // tq                                 # always even (tq | b) -> v7x megacore
        shift = b // tq                                 # positive-pair shift in whole row tiles
        per_row = _row_block_call(
            zq_op, zk_op, zk_op, n=n, d=d, tq=tq,
            zp_index_map=lambda qi: ((qi + shift) % num_q, 0), inv_temp=inv_temp)

    elif path == "tiled":
        if tk is None:
            tk = _largest_tile(n, 2048, 128) or _largest_tile(n, 512, 8)
        assert tk is not None and n % tk == 0 and tk % 8 == 0, (n, tk)
        lane_w = 128 if tk % 128 == 0 else tk
        if tq is None:
            cand = _largest_tile(b, 1024, 8)
            while cand is not None and _tiled_vmem(d, cand, tk, lane_w, elt) > _ROW_BLOCK_BUDGET:
                cand = _largest_tile(b, cand - 8, 8)
            tq = cand
        assert tq is not None and b % tq == 0 and tq % 8 == 0, (b, tq)
        num_q, num_k = n // tq, n // tk
        shift = b // tq
        kernel = functools.partial(_tiled_kernel, inv_temp=inv_temp, lane_w=lane_w)
        per_row = pl.pallas_call(
            kernel,
            out_shape=jax.ShapeDtypeStruct((n, 1), jnp.float32),
            grid=(num_q, num_k),
            in_specs=[
                pl.BlockSpec((tq, d), lambda qi, ki: (qi, 0)),                    # queries
                pl.BlockSpec((tq, d), lambda qi, ki: ((qi + shift) % num_q, 0)),  # positives
                pl.BlockSpec((tk, d), lambda qi, ki: (ki, 0)),                    # key stream
            ],
            out_specs=pl.BlockSpec((tq, 1), lambda qi, ki: (qi, 0)),
            scratch_shapes=[pltpu.VMEM((tq, lane_w), jnp.float32)],
            compiler_params=pltpu.CompilerParams(
                dimension_semantics=("parallel", "arbitrary"),
                vmem_limit_bytes=_VMEM_LIMIT),
        )(zq_op, zk_op, zk_op)
    else:
        raise ValueError(f"unknown path {path!r}")

    # Tiny wrapper-side finalize: mean over the 2B per-row losses.
    return jnp.mean(per_row)


# --------------------------------------------------------------------------------------
# Pure-JAX reference (mirrors the PyTorch forward exactly)
# --------------------------------------------------------------------------------------
def _contrast_loss_ref(x_i, x_j, temperature=0.5):
    b = x_i.shape[0]

    def normalize(x):
        nrm = jnp.sqrt(jnp.sum(x * x, axis=1, keepdims=True))
        return x / jnp.maximum(nrm, 1e-12)

    z = jnp.concatenate([normalize(x_i), normalize(x_j)], axis=0)
    sim = (z @ z.T) / temperature
    n = 2 * b
    sim_i_j = jnp.diagonal(sim, offset=b)
    sim_j_i = jnp.diagonal(sim, offset=-b)
    pos = jnp.concatenate([sim_i_j, sim_j_i]).reshape(n, 1)
    neg_mask = ~jnp.eye(n, dtype=bool)
    e = jnp.exp(sim)
    exp_pos = jnp.exp(pos)
    exp_neg = jnp.sum(jnp.where(neg_mask, e, 0.0), axis=1, keepdims=True)
    return jnp.mean(-jnp.log(exp_pos / (exp_pos + exp_neg)))


if __name__ == "__main__":
    key = jax.random.PRNGKey(0)
    ks = jax.random.split(key, 8)

    # Case 1: small batch (multiple of 8) -> auto single-block path; f32 operands, tight tol.
    b1, d1 = 8, 32
    x_i = jax.random.normal(ks[0], (b1, d1), jnp.float32)
    x_j = jax.random.normal(ks[1], (b1, d1), jnp.float32)
    ref1 = jax.block_until_ready(_contrast_loss_ref(x_i, x_j, 0.5))
    out1 = jax.block_until_ready(contrast_loss(x_i, x_j, 0.5, matmul_dtype=jnp.float32))
    assert jnp.allclose(out1, ref1, atol=1e-4, rtol=1e-4), ("single", out1, ref1)

    # Case 2: batch not a multiple of 8 -> single-block fallback (rolled positives, no masks).
    b2, d2 = 4, 32
    y_i = jax.random.normal(ks[2], (b2, d2), jnp.float32)
    y_j = jax.random.normal(ks[3], (b2, d2), jnp.float32)
    ref2 = jax.block_until_ready(_contrast_loss_ref(y_i, y_j, 0.5))
    out2 = jax.block_until_ready(contrast_loss(y_i, y_j, 0.5, matmul_dtype=jnp.float32))
    assert jnp.allclose(out2, ref2, atol=1e-4, rtol=1e-4), ("fallback", out2, ref2)

    # Case 3: resident-key 1-D grid path; bf16 MXU operands (default) + f32 check.
    b3, d3 = 64, 128
    u_i = jax.random.normal(ks[4], (b3, d3), jnp.float32)
    u_j = jax.random.normal(ks[5], (b3, d3), jnp.float32)
    ref3 = jax.block_until_ready(_contrast_loss_ref(u_i, u_j, 0.5))
    out3_bf = jax.block_until_ready(contrast_loss(u_i, u_j, 0.5, path="resident"))
    assert jnp.allclose(out3_bf, ref3, atol=3e-2, rtol=3e-2), ("resident bf16", out3_bf, ref3)
    out3_f32 = jax.block_until_ready(
        contrast_loss(u_i, u_j, 0.5, path="resident", matmul_dtype=jnp.float32))
    assert jnp.allclose(out3_f32, ref3, atol=1e-4, rtol=1e-4), ("resident f32", out3_f32, ref3)

    # Case 4: 2-D tiled (streaming-key) path with the lane-blocked accumulator, grid (4, 2).
    b4, d4 = 128, 32
    v_i = jax.random.normal(ks[6], (b4, d4), jnp.float32)
    v_j = jax.random.normal(ks[7], (b4, d4), jnp.float32)
    ref4 = jax.block_until_ready(_contrast_loss_ref(v_i, v_j, 0.5))
    out4_f32 = jax.block_until_ready(
        contrast_loss(v_i, v_j, 0.5, path="tiled", tq=64, tk=128, matmul_dtype=jnp.float32))
    assert jnp.allclose(out4_f32, ref4, atol=1e-4, rtol=1e-4), ("tiled f32", out4_f32, ref4)
    out4_bf = jax.block_until_ready(
        contrast_loss(v_i, v_j, 0.5, path="tiled", tq=64, tk=128))
    assert jnp.allclose(out4_bf, ref4, atol=3e-2, rtol=3e-2), ("tiled bf16", out4_bf, ref4)

    print("KERNEL_OK")
</pallas_src>

<mosaic_0001>
module attributes {stable_mosaic.version = 11 : i64} {
  func.func @_row_block_kernel(%arg0: i32, %arg1: memref<16x32xf32, #tpu.memory_space<vmem>>, %arg2: memref<16x32xf32, #tpu.memory_space<vmem>>, %arg3: memref<16x32xf32, #tpu.memory_space<vmem>>, %arg4: memref<16x1xf32, #tpu.memory_space<vmem>>) attributes {dimension_semantics = [#tpu.dimension_semantics<parallel>], iteration_bounds = array<i64: 1>, scalar_prefetch = 0 : i64, scratch_operands = 0 : i64, tpu.core_type = #tpu.core_type<tc>, window_params = [{transform_indices = @transform_0, window_bounds = array<i64: 16, 32>}, {transform_indices = @transform_1, window_bounds = array<i64: 16, 32>}, {pipeline_mode = #tpu.pipeline_mode<synchronous>, transform_indices = @transform_2, window_bounds = array<i64: 16, 32>}, {transform_indices = @transform_3, window_bounds = array<i64: 16, 1>}]} {
    %c0 = arith.constant 0 : index
    %c0_0 = arith.constant 0 : index
    %0 = vector.load %arg1[%c0, %c0_0] : memref<16x32xf32, #tpu.memory_space<vmem>>, vector<16x32xf32>
    %c0_1 = arith.constant 0 : index
    %c0_2 = arith.constant 0 : index
    %1 = vector.load %arg3[%c0_1, %c0_2] : memref<16x32xf32, #tpu.memory_space<vmem>>, vector<16x32xf32>
    %cst = arith.constant dense<0.000000e+00> : vector<16x16xf32>
    %2 = tpu.matmul %0, %1, %cst {dimension_numbers = #tpu.dot_dimension_numbers<[1], [1], [0], [0], [0, 0, 1, 0], [], []>} : vector<16x32xf32>, vector<16x32xf32>, vector<16x16xf32> -> vector<16x16xf32>
    %cst_3 = arith.constant 2.000000e+00 : f32
    %3 = vector.broadcast %cst_3 : f32 to vector<16x16xf32>
    %4 = arith.subf %2, %3 : vector<16x16xf32>
    %5 = math.exp %4 : vector<16x16xf32>
    %cst_4 = arith.constant dense<0.000000e+00> : vector<16xf32>
    %6 = vector.multi_reduction <add>, %5, %cst_4 [1] : vector<16x16xf32> to vector<16xf32>
    %7 = vector.shape_cast %6 : vector<16xf32> to vector<16x1xf32>
    %cst_5 = arith.constant 1.000000e+00 : f32
    %8 = vector.broadcast %cst_5 : f32 to vector<16x1xf32>
    %9 = arith.subf %7, %8 : vector<16x1xf32>
    %c0_6 = arith.constant 0 : index
    %c0_7 = arith.constant 0 : index
    %10 = vector.load %arg2[%c0_6, %c0_7] : memref<16x32xf32, #tpu.memory_space<vmem>>, vector<16x32xf32>
    %11 = arith.mulf %0, %10 : vector<16x32xf32>
    %cst_8 = arith.constant dense<0.000000e+00> : vector<16xf32>
    %12 = vector.multi_reduction <add>, %11, %cst_8 [1] : vector<16x32xf32> to vector<16xf32>
    %13 = vector.shape_cast %12 : vector<16xf32> to vector<16x1xf32>
    %cst_9 = arith.constant 2.000000e+00 : f32
    %14 = vector.broadcast %cst_9 : f32 to vector<16x1xf32>
    %15 = arith.subf %13, %14 : vector<16x1xf32>
    %16 = math.exp %15 : vector<16x1xf32>
    %17 = arith.addf %16, %9 : vector<16x1xf32>
    %18 = math.log %17 : vector<16x1xf32>
    %19 = arith.subf %18, %15 : vector<16x1xf32>
    %c0_10 = arith.constant 0 : index
    %c0_11 = arith.constant 0 : index
    %20 = vector.load %arg4[%c0_10, %c0_11] : memref<16x1xf32, #tpu.memory_space<vmem>>, vector<16x1xf32>
    tpu.vector_store %arg4[%c0_10, %c0_11], %19 {strides = array<i32>} : memref<16x1xf32, #tpu.memory_space<vmem>>, vector<16x1xf32>,
    return
  }
  func.func @transform_0(%arg0: i32) -> (i32, i32) {
    %c0_i32 = arith.constant 0 : i32
    %c0_i32_0 = arith.constant 0 : i32
    return %arg0, %c0_i32 : i32, i32
  }
  func.func @transform_1(%arg0: i32) -> (i32, i32) {
    %c0_i32 = arith.constant 0 : i32
    %c0_i32_0 = arith.constant 0 : i32
    return %arg0, %c0_i32 : i32, i32
  }
  func.func @transform_2(%arg0: i32) -> (i32, i32) {
    %c0_i32 = arith.constant 0 : i32
    %c0_i32_0 = arith.constant 0 : i32
    %c0_i32_1 = arith.constant 0 : i32
    return %c0_i32, %c0_i32_0 : i32, i32
  }
  func.func @transform_3(%arg0: i32) -> (i32, i32) {
    %c0_i32 = arith.constant 0 : i32
    %c0_i32_0 = arith.constant 0 : i32
    return %arg0, %c0_i32 : i32, i32
  }
}

</mosaic_0001>

<llo_original>
// kernel: tpu_custom_call.1
$region0: #{tpu_custom_call.1}
  #allocation0 [shape = 'u32[]', space=smem, size = 0x4, offset = 0x4, fixed_abs, tag = 'smem constant byte address 0x4 - core index']
  #allocation1 [shape = 'u32[144,128]{1,0:T(1,128)}', space=vmem, size = 0x12000, scoped, tag = 'internal scratch']
  %s0 = inlined_call_operand.hbm [shape: f32[16,32], index: 0, kind: input, shape index: {}]
  %s1 = inlined_call_operand.hbm [shape: f32[16,32], index: 1, kind: input, shape index: {}]
  %s2 = inlined_call_operand.hbm [shape: f32[16,32], index: 2, kind: input, shape index: {}]
  %s3 = inlined_call_operand.vmem [shape: f32[16,1], index: 3, kind: output, shape index: {}]
  %s4 = sld [smem:[#allocation0]]
  $region34: #{tpu_custom_call.1} parent=0
    _
  %s6 = ssub.s32 1, %s4
  %s7 = scalar_select 0, %s6, %s4
  $region1: #{tpu_custom_call.1} parent=0
    #allocation2 [shape = 'u8[8192]{0}', space=vmem, size = 0x2000, scoped, tag = 'input window, operand 0, single buffered']
    #allocation3 [shape = 's32[1]{0}', space=sflag, size = 0x4, scoped, tag = 'scoped memory for tpu_custom_call.1']
    #allocation4 [shape = 'u8[8192]{0}', space=vmem, size = 0x2000, scoped, tag = 'input window, operand 1, single buffered']
    #allocation5 [shape = 's32[1]{0}', space=sflag, size = 0x4, scoped, tag = 'scoped memory for tpu_custom_call.1']
    #allocation6 [shape = 'u8[8192]{0}', space=vmem, size = 0x2000, scoped, tag = 'input window, operand 2, single buffered']
    %8 = vsyncpa [#allocation3], 0
    %9 = vsyncpa [#allocation5], 0
    // Predicated region
    $region2: #{tpu_custom_call.1} parent=1 // pred_check
      _
    $region3: #{tpu_custom_call.1} parent=1 // pred_check_branch
      %11 = sbr.rel (0) target = $region5
    $region4: #{tpu_custom_call.1} parent=1 // pred_region
      %s13 = ssub.s32 256, 256
      %14 = vsyncadd [#allocation3], %s13
      %s15 = sshll.u32 [#allocation2], 4
      %s16 = int_to_ptr.vmem [resolvable:$true] %s15
      %21 = dma.hbm_to_vmem [thread:$0]  %s0, 256, %s16, [#allocation3], 128, 128, 8
    $region5: #{tpu_custom_call.1} parent=1 // pred_fallthru
      _
    // Predicated region
    $region6: #{tpu_custom_call.1} parent=1 // pred_check
      _
    $region7: #{tpu_custom_call.1} parent=1 // pred_check_branch
      %23 = sbr.rel (0) target = $region9
    $region8: #{tpu_custom_call.1} parent=1 // pred_region
      %s25 = ssub.s32 256, 256
      %26 = vsyncadd [#allocation5], %s25
      %s27 = sshll.u32 [#allocation4], 4
      %s28 = int_to_ptr.vmem [resolvable:$true] %s27
      %33 = dma.hbm_to_vmem [thread:$0]  %s1, 256, %s28, [#allocation5], 128, 128, 8
    $region9: #{tpu_custom_call.1} parent=1 // pred_fallthru
      _
    // Predicated region
    $region10: #{tpu_custom_call.1} parent=1 // pred_check
      _
    $region11: #{tpu_custom_call.1} parent=1 // pred_check_branch
      %35 = sbr.rel (0) target = $region13
    $region12: #{tpu_custom_call.1} parent=1 // pred_region
      %s37 = ssub.s32 256, 256
      %38 = vsyncadd [#allocation5], %s37
      %s39 = sshll.u32 [#allocation6], 4
      %s40 = int_to_ptr.vmem [resolvable:$true] %s39
      %45 = dma.hbm_to_vmem [thread:$0]  %s2, 256, %s40, [#allocation5], 128, 128, 8
    $region13: #{tpu_custom_call.1} parent=1 // pred_fallthru
      _
    // Predicated region
    $region14: #{tpu_custom_call.1} parent=1 // pred_check
      _
    $region15: #{tpu_custom_call.1} parent=1 // pred_check_branch
      %47 = sbr.rel (0) target = $region17
    $region16: #{tpu_custom_call.1} parent=1 // pred_region
      %48 = dma.done [#allocation3], 256
    $region17: #{tpu_custom_call.1} parent=1 // pred_fallthru
      _
    // Predicated region
    $region18: #{tpu_custom_call.1} parent=1 // pred_check
      _
    $region19: #{tpu_custom_call.1} parent=1 // pred_check_branch
      %50 = sbr.rel (0) target = $region21
    $region20: #{tpu_custom_call.1} parent=1 // pred_region
      %51 = dma.done [#allocation5], 256
    $region21: #{tpu_custom_call.1} parent=1 // pred_fallthru
      _
    // Predicated region
    $region22: #{tpu_custom_call.1} parent=1 // pred_check
      _
    $region23: #{tpu_custom_call.1} parent=1 // pred_check_branch
      %53 = sbr.rel (0) target = $region25
    $region24: #{tpu_custom_call.1} parent=1 // pred_region
      %54 = dma.done [#allocation5], 256
    $region25: #{tpu_custom_call.1} parent=1 // pred_fallthru
      _
    %v55 = vld [vmem:[#allocation2] sm:$0xff]
    %v56 = vld [vmem:[#allocation2 + $0x8] sm:$0xff]
    %v57 = vld [vmem:[#allocation6] sm:$0xff]
    %v58 = vld [vmem:[#allocation6 + $0x8] sm:$0xff]
    %vm59 = vcmask 261120
    %v61 = vsel %vm59, %v55, 0
    %v64 = vsel %vm59, %v56, 0
    %v67 = vsel %vm59, %v57, 0
    %v70 = vsel %vm59, %v58, 0
    %72 = vmatprep.subr.mxu0 0.0
    %73 = vmatpush1.xpose.msra.mxu0 %v67
    %74 = vmatprep.subr.mxu0 0.0
    %75 = vmatpush1.xpose.msra.mxu0 %v70
    %76 = vmatprep.subr.mxu0 0.0
    %77 = vmatpush1.xpose.msra.mxu0 0.0
    %78 = vmatprep.subr.mxu0 0.0
    %79 = vmatpush1.xpose.msra.mxu0 0.0
    %80 = vmatprep.subr.mxu0 0.0
    %81 = vmatpush1.xpose.msra.mxu0 0.0
    %82 = vmatprep.subr.mxu0 0.0
    %83 = vmatpush1.xpose.msra.mxu0 0.0
    %84 = vmatprep.subr.mxu0 0.0
    %85 = vmatpush1.xpose.msra.mxu0 0.0
    %86 = vmatprep.subr.mxu0 0.0
    %87 = vmatpush1.xpose.msra.mxu0 0.0
    %88 = vmatprep.subr.mxu0 0.0
    %89 = vmatpush1.xpose.msra.mxu0 0.0
    %90 = vmatprep.subr.mxu0 0.0
    %91 = vmatpush1.xpose.msra.mxu0 0.0
    %92 = vmatprep.subr.mxu0 0.0
    %93 = vmatpush1.xpose.msra.mxu0 0.0
    %94 = vmatprep.subr.mxu0 0.0
    %95 = vmatpush1.xpose.msra.mxu0 0.0
    %96 = vmatprep.subr.mxu0 0.0
    %97 = vmatpush1.xpose.msra.mxu0 0.0
    %98 = vmatprep.subr.mxu0 0.0
    %99 = vmatpush1.xpose.msra.mxu0 0.0
    %100 = vmatprep.subr.mxu0 0.0
    %101 = vmatpush1.xpose.msra.mxu0 0.0
    %102 = vmatprep.subr.mxu0 0.0
    %103 = vmatpush1.xpose.msra.mxu0 0.0
    %104 = vmatprep.subr.mxu0 0.0
    %105 = vmatpush1.xpose.msra.mxu0 0.0
    %106 = vmatprep.subr.mxu0 0.0
    %107 = vmatpush1.xpose.msra.mxu0 0.0
    %108 = vmatprep.subr.mxu0 0.0
    %109 = vmatpush1.xpose.msra.mxu0 0.0
    %110 = vmatprep.subr.mxu0 0.0
    %111 = vmatpush1.xpose.msra.mxu0 0.0
    %112 = vmatprep.subr.mxu0 0.0
    %113 = vmatpush1.xpose.msra.mxu0 0.0
    %114 = vmatprep.subr.mxu0 0.0
    %115 = vmatpush1.xpose.msra.mxu0 0.0
    %116 = vmatprep.subr.mxu0 0.0
    %117 = vmatpush1.xpose.msra.mxu0 0.0
    %118 = vmatprep.subr.mxu0 0.0
    %119 = vmatpush1.xpose.msra.mxu0 0.0
    %120 = vmatprep.subr.mxu0 0.0
    %121 = vmatpush1.xpose.msra.mxu0 0.0
    %122 = vmatprep.subr.mxu0 0.0
    %123 = vmatpush1.xpose.msra.mxu0 0.0
    %124 = vmatprep.subr.mxu0 0.0
    %125 = vmatpush1.xpose.msra.mxu0 0.0
    %126 = vmatprep.subr.mxu0 0.0
    %127 = vmatpush1.xpose.msra.mxu0 0.0
    %128 = vmatprep.subr.mxu0 0.0
    %129 = vmatpush1.xpose.msra.mxu0 0.0
    %130 = vmatprep.subr.mxu0 0.0
    %131 = vmatpush1.xpose.msra.mxu0 0.0
    %132 = vmatprep.subr.mxu0 0.0
    %133 = vmatpush1.xpose.msra.mxu0 0.0
    %134 = vmatprep.subr.mxu0 0.0
    %135 = vmatpush1.xpose.msra.mxu0 0.0
    %136 = vmatprep.mubr.f32.mxu0 0.0
    %137 = vmatmul.mubr.f32.gmra.mrb[0].mxu0 %v61
    %v138 = vpop.f32.mrb[0].mxu0
    %v139 = vadd.f32 0.0, %v138
    %v140 = vpop.f32.mrb[0].mxu0
    %141 = vmatprep.mubr.f32.mxu0 0.0
    %142 = vmatmul.mubr.f32.gmra.mrb[0].mxu0 %v64
    %v143 = vpop.f32.mrb[0].mxu0
    %v144 = vadd.f32 0.0, %v143
    %v145 = vpop.f32.mrb[0].mxu0
    %146 = vdwg.mxu0
    %v147 = vsub.f32 %v139, 2.0
    %v148 = vsub.f32 %v144, 2.0
    %v149 = vmul.f32 %v147, 1.442695
    %v150 = vpow.pop %v149
    %v151 = vmul.f32 %v148, 1.442695
    %v152 = vpow.pop %v151
    %vm153 = vcmask 130048
    %v154 = vsel %vm153, %v150, 0.0
    %155 = vadd.xlane.f32.xlu0 %v154
    %v156 = vpop.xlane.xlu0 %155
    %v157 = vsel %vm153, %v152, 0.0
    %158 = vadd.xlane.f32.xlu0 %v157
    %v159 = vpop.xlane.xlu0 %158
    %v160 = vsub.f32 %v156, 1.0
    %v161 = vsub.f32 %v159, 1.0
    %v162 = vld [vmem:[#allocation4] sm:$0xff]
    %v163 = vld [vmem:[#allocation4 + $0x8] sm:$0xff]
    %v164 = vmul.f32 %v55, %v162
    %v165 = vmul.f32 %v56, %v163
    %v166 = vsel %vm59, %v164, 0.0
    %167 = vadd.xlane.f32.xlu0 %v166
    %v168 = vpop.xlane.xlu0 %167
    %v169 = vsel %vm59, %v165, 0.0
    %170 = vadd.xlane.f32.xlu0 %v169
    %v171 = vpop.xlane.xlu0 %170
    %v172 = vsub.f32 %v168, 2.0
    %v173 = vsub.f32 %v171, 2.0
    %v174 = vmul.f32 %v172, 1.442695
    %v175 = vpow.pop %v174
    %v176 = vmul.f32 %v173, 1.442695
    %v177 = vpow.pop %v176
    %v178 = vadd.f32 %v175, %v160
    %v179 = vadd.f32 %v177, %v161
    %v180 = vlog2.pop %v178
    %v181 = vmul.f32 %v180, 0.6931472
    %v182 = vlog2.pop %v179
    %v183 = vmul.f32 %v182, 0.6931472
    %v184 = vsub.f32 %v181, %v172
    %v185 = vsub.f32 %v183, %v173
    %vm186 = vcmask 7168
    %187 = vst.msk [vmem:[%s3] sm:$0xff] %vm186, %v184
    %188 = vst.msk [vmem:[%s3 + $0x8] sm:$0xff] %vm186, %v185
    // Predicated region
    $region26: #{tpu_custom_call.1} parent=1 // pred_check
      _
    $region27: #{tpu_custom_call.1} parent=1 // pred_check_branch
      %190 = sbr.rel (0) target = $region29
    $region28: #{tpu_custom_call.1} parent=1 // pred_region
      _
    $region29: #{tpu_custom_call.1} parent=1 // pred_fallthru
      _
    // Predicated region
    $region30: #{tpu_custom_call.1} parent=1 // pred_check
      _
    $region31: #{tpu_custom_call.1} parent=1 // pred_check_branch
      %192 = sbr.rel (0) target = $region33
    $region32: #{tpu_custom_call.1} parent=1 // pred_region
      _
    $region33: #{tpu_custom_call.1} parent=1 // pred_fallthru
      _
    %193 = vsyncpa [#allocation3], 1
    %194 = vsyncpa [#allocation5], 1

</llo_original>
